<compile_context>
chip_gen: v7x
topology: tpu7x:2x2x1
jax: 0.10.0
libtpu: 0.0.40
codegen_flags: <defaults>
</compile_context>

<pallas_src>
import jax
import jax.numpy as jnp
from jax.experimental import pallas as pl
from jax.experimental.pallas import tpu as pltpu


# ----------------------------------------------------------------------------
# Config helpers (mirror gen_dx_bx / create_frustum of the PyTorch module)
# ----------------------------------------------------------------------------
def gen_dx_bx(xbound, ybound, zbound, dbound=None):
    rows = [xbound, ybound, zbound]
    dx = jnp.asarray([r[2] for r in rows], dtype=jnp.float32)
    bx = jnp.asarray([r[0] + r[2] / 2.0 for r in rows], dtype=jnp.float32)
    nx = jnp.asarray([int((r[1] - r[0]) / r[2]) for r in rows], dtype=jnp.int32)
    return dx, bx, nx


def create_frustum(final_dim, downsample):
    ogfH, ogfW = final_dim
    fH, fW = ogfH // downsample, ogfW // downsample
    xs = jnp.broadcast_to(
        jnp.linspace(0.0, ogfW - 1, fW, dtype=jnp.float32)[None, :], (fH, fW))
    ys = jnp.broadcast_to(
        jnp.linspace(0.0, ogfH - 1, fH, dtype=jnp.float32)[:, None], (fH, fW))
    ds = jnp.ones_like(xs)
    return jnp.stack([xs, ys, ds], axis=-1)  # (fH, fW, 3)


def _round_up(x, m):
    return ((x + m - 1) // m) * m


# ----------------------------------------------------------------------------
# Pallas kernel: fused per-point affine geometry on lane-dense (rows, S, 128)
# ----------------------------------------------------------------------------
def _geom_kernel(pts_ref, coef_ref, out_ref):
    # pts_ref : (3, s_tile, 128)  rows = [u, v, pooled_depth]
    # coef_ref: (12, s_tile, 128) rows = [A00,A10,A20, A01,A11,A21, e0,e1,e2, t0,t1,t2]
    # out_ref : (3, s_tile, 128)  rows = [x, y, z] in the ego frame
    u = pts_ref[0]
    v = pts_ref[1]
    d = pts_ref[2]
    d = jnp.where(d == 0.0, jnp.float32(200.0), d)  # zero lidar depth -> 200.0
    # Unrolled fused matvec on the VPU (K=3 would waste the MXU).
    for k in range(3):
        r = d * (coef_ref[k] * u + coef_ref[3 + k] * v + coef_ref[6 + k]) \
            + coef_ref[9 + k]
        # Each store is a full (s_tile, 128) tile slab -> unmasked full-width vst.
        out_ref[k] = r


def geometry_pallas(pts, coef, max_lanes_per_step=16384):
    """pts: (3, L) rows [u, v, depth]; coef: (12, L) per-lane fused coefficients.
    Returns (3, L) ego-frame xyz."""
    L = pts.shape[1]
    # Pad lanes so each row folds into full (8,128) tiles (multiple of 1024 lanes).
    L_pad = _round_up(max(L, 1024), 1024)
    if L_pad <= max_lanes_per_step:
        lanes_per_step = L_pad
    else:
        lanes_per_step = max_lanes_per_step
        L_pad = _round_up(L_pad, lanes_per_step)
    S = L_pad // 128
    s_tile = lanes_per_step // 128  # multiple of 8

    pts_p = jnp.pad(pts, ((0, 0), (0, L_pad - L))).reshape(3, S, 128)
    coef_p = jnp.pad(coef, ((0, 0), (0, L_pad - L))).reshape(12, S, 128)

    out = pl.pallas_call(
        _geom_kernel,
        out_shape=jax.ShapeDtypeStruct((3, S, 128), jnp.float32),
        grid=(S // s_tile,),
        in_specs=[
            pl.BlockSpec((3, s_tile, 128), lambda i: (0, i, 0)),
            pl.BlockSpec((12, s_tile, 128), lambda i: (0, i, 0)),
        ],
        out_specs=pl.BlockSpec((3, s_tile, 128), lambda i: (0, i, 0)),
        compiler_params=pltpu.CompilerParams(
            dimension_semantics=("parallel",)),  # lets v7x shard across 2 TCs
    )(pts_p, coef_p)
    return out.reshape(3, L_pad)[:, :L]


# ----------------------------------------------------------------------------
# Wrapper-side coefficient fusion and lane-dense slab construction (glue)
# ----------------------------------------------------------------------------
def fused_camera_coefs(rots, trans, intrins, post_rots, post_trans):
    """Fold combine@(d*inv(post_rots)@(f-pt))+t into a single affine per camera.
    Returns (B*N, 12): [A[:,0], A[:,1], e, trans] with A = rots@inv(intrins)@inv(post_rots)
    and e = A[:,2] - A@post_trans (homogeneous coord f2==1 folded in)."""
    B, N = trans.shape[:2]
    f32 = jnp.float32
    ipr = jnp.linalg.inv(post_rots.astype(f32))
    combine = jnp.matmul(rots.astype(f32), jnp.linalg.inv(intrins.astype(f32)))
    A = jnp.matmul(combine, ipr)                                      # (B,N,3,3)
    Apt = jnp.matmul(A, post_trans.astype(f32)[..., None])[..., 0]    # (B,N,3)
    e = A[..., :, 2] - Apt
    coef = jnp.concatenate(
        [A[..., :, 0], A[..., :, 1], e, trans.astype(f32)], axis=-1)  # (B,N,12)
    return coef.reshape(B * N, 12)


def build_geometry_inputs(num_levels, lidar_img, final_dim, coef_cam, B, N):
    """One lane per (camera, level, pixel): returns pts (3,L), coef (12,L), meta."""
    BN = B * N
    pts_parts, coef_parts, meta = [], [], []
    for i in range(num_levels):
        ds = 2 ** (4 - i)                              # 16 then 8
        fH, fW = final_dim[0] // ds, final_dim[1] // ds
        P = fH * fW
        frustum = create_frustum(final_dim, ds)        # (fH, fW, 3)
        u = jnp.broadcast_to(frustum[..., 0].reshape(1, P), (BN, P))
        v = jnp.broadcast_to(frustum[..., 1].reshape(1, P), (BN, P))
        # lidar_resizer: MaxPool2d(ds) — glue reduction kept in plain JAX.
        pooled = lidar_img.astype(jnp.float32).reshape(
            B, N, fH, ds, fW, ds).max(axis=(3, 5)).reshape(BN, P)
        pts_parts.append(jnp.stack([u, v, pooled], axis=0).reshape(3, BN * P))
        coef_parts.append(
            jnp.broadcast_to(coef_cam.T[:, :, None], (12, BN, P)).reshape(12, BN * P))
        meta.append((fH, fW, P))
    return (jnp.concatenate(pts_parts, axis=1),
            jnp.concatenate(coef_parts, axis=1), meta)


def split_geometry(geom_flat, meta, B, N):
    """(3, L) -> list of (B, N, fH, fW, 3) per FPN level."""
    BN = B * N
    geoms, off = [], 0
    for (fH, fW, P) in meta:
        g = geom_flat[:, off:off + BN * P].reshape(3, B, N, fH, fW)
        geoms.append(jnp.transpose(g, (1, 2, 3, 4, 0)))
        off += BN * P
    return geoms


# ----------------------------------------------------------------------------
# voxel_pooling (plain JAX): quantize -> filter -> per-voxel sum -> scatter
# ----------------------------------------------------------------------------
def voxel_pooling_jax(geom, feats, dx, bx, nx):
    # TODO(synk): argsort + QuickCumsum + scatter has no clean Pallas equivalent;
    # it is numerically a per-voxel scatter-add, done here with jnp .at[].add.
    B, N, H, W, C = feats.shape
    nx0, nx1, nx2 = nx
    Nprime = B * N * H * W

    x = feats.reshape(Nprime, C)
    # torch .long() truncates toward zero; jnp float->int cast does the same.
    g = ((geom - (bx - dx / 2.0)) / dx).astype(jnp.int32).reshape(Nprime, 3)
    batch_ix = jnp.repeat(jnp.arange(B, dtype=jnp.int32), Nprime // B)

    kept = ((g[:, 0] >= 0) & (g[:, 0] < nx0) &
            (g[:, 1] >= 0) & (g[:, 1] < nx1) &
            (g[:, 2] >= 0) & (g[:, 2] < nx2))
    gx = jnp.clip(g[:, 0], 0, nx0 - 1)
    gy = jnp.clip(g[:, 1], 0, nx1 - 1)
    gz = jnp.clip(g[:, 2], 0, nx2 - 1)
    xw = x * kept[:, None].astype(x.dtype)

    flat_idx = ((batch_ix * nx2 + gz) * nx0 + gx) * nx1 + gy
    flat = jnp.zeros((B * nx2 * nx0 * nx1, C), dtype=x.dtype)
    flat = flat.at[flat_idx].add(xw)
    final = flat.reshape(B, nx2, nx0, nx1, C)
    # torch: final (B,C,nz,nx,ny); cat(unbind(dim=2), 1) -> (B, nz*C, nx, ny)
    final = jnp.transpose(final, (0, 1, 4, 2, 3)).reshape(B, nx2 * C, nx0, nx1)
    return final


# ----------------------------------------------------------------------------
# Full forward (matches lidar_projection.forward semantics)
# ----------------------------------------------------------------------------
def lidar_projection_forward(x_list, lidar_img, rots, trans, intrins, post_rots,
                             post_trans, shape_info, grid_conf, final_dim,
                             camC=64, use_fpn=False):
    B, N, imH, imW = shape_info
    dx, bx, nx = gen_dx_bx(**grid_conf)
    nx_t = tuple(int(v) for v in nx)

    # Per-camera fused affine coefficients (3x3 inverses stay in plain JAX).
    coef_cam = fused_camera_coefs(rots, trans, intrins, post_rots, post_trans)

    # One Pallas launch for all cameras and all FPN levels.
    pts_all, coef_all, meta = build_geometry_inputs(
        len(x_list), lidar_img, final_dim, coef_cam, B, N)
    geom_flat = geometry_pallas(pts_all, coef_all)
    geoms = split_geometry(geom_flat, meta, B, N)

    outs = []
    for i, (fH, fW, P) in enumerate(meta):
        ds = 2 ** (4 - i)
        feat = jnp.transpose(
            x_list[i].reshape(B, N, camC, imH // ds, imW // ds),
            (0, 1, 3, 4, 2))                           # (B, N, H, W, C)
        outs.append(voxel_pooling_jax(geoms[i], feat, dx, bx, nx_t))

    if use_fpn:
        return outs[0] + outs[1]
    return outs[0]


# ----------------------------------------------------------------------------
# Pure-JAX geometry reference (mirrors torch get_geometry)
# ----------------------------------------------------------------------------
def _geometry_ref(frustum, ipr, comb, post_trans, trans, pooled):
    d = jnp.where(pooled == 0.0, 200.0, pooled)
    pts = frustum[None, None] - post_trans[:, :, None, None, :]
    pts = jnp.einsum('bnij,bnhwj->bnhwi', ipr, pts)
    pts = pts * d[..., None]
    pts = jnp.einsum('bnij,bnhwj->bnhwi', comb, pts)
    return pts + trans[:, :, None, None, :]


# ----------------------------------------------------------------------------
# Demo
# ----------------------------------------------------------------------------
if __name__ == "__main__":
    key = jax.random.PRNGKey(0)
    B, N = 2, 2
    imH = imW = 128
    camC = 64                       # fixed in the torch module
    final_dim = (imH, imW)
    grid_conf = dict(
        xbound=[-8.0, 8.0, 0.5],    # nx0 = 32
        ybound=[-8.0, 8.0, 0.5],    # nx1 = 32
        zbound=[-5.0, 5.0, 10.0],   # nx2 = 1
        dbound=[1.0, 30.0, 1.0],    # unused by the projection path
    )

    ks = jax.random.split(key, 8)
    x0 = jax.random.normal(ks[0], (B * N, camC, imH // 16, imW // 16), dtype=jnp.float32)
    x1 = jax.random.normal(ks[1], (B * N, camC, imH // 8, imW // 8), dtype=jnp.float32)

    depth_vals = jax.random.uniform(ks[2], (B, N, imH, imW), minval=0.5, maxval=9.5)
    zero_mask = jax.random.uniform(ks[3], (B, N, imH, imW)) < 0.05
    lidar_img = jnp.where(zero_mask, 0.0, depth_vals).astype(jnp.float32)

    eye = jnp.broadcast_to(jnp.eye(3, dtype=jnp.float32), (B, N, 3, 3))
    rots = eye + 0.01 * jax.random.normal(ks[4], (B, N, 3, 3), dtype=jnp.float32)
    post_rots = eye + 0.01 * jax.random.normal(ks[5], (B, N, 3, 3), dtype=jnp.float32)
    intrins = jnp.broadcast_to(
        jnp.array([[64.0, 0.0, 64.0],
                   [0.0, 64.0, 64.0],
                   [0.0, 0.0, 1.0]], dtype=jnp.float32), (B, N, 3, 3))
    trans = 0.1 * jax.random.normal(ks[6], (B, N, 3), dtype=jnp.float32)
    post_trans = 0.5 * jax.random.normal(ks[7], (B, N, 3), dtype=jnp.float32)

    shape_info = (B, N, imH, imW)

    # --- sanity check: fused Pallas geometry vs pure-JAX reference (both levels) ---
    coef_cam = fused_camera_coefs(rots, trans, intrins, post_rots, post_trans)
    pts_all, coef_all, meta = build_geometry_inputs(2, lidar_img, final_dim,
                                                    coef_cam, B, N)
    geom_flat = geometry_pallas(pts_all, coef_all)
    geoms = split_geometry(geom_flat, meta, B, N)

    ipr = jnp.linalg.inv(post_rots)
    comb = jnp.matmul(rots, jnp.linalg.inv(intrins))
    for i, (fH, fW, P) in enumerate(meta):
        ds = 2 ** (4 - i)
        frustum = create_frustum(final_dim, ds)
        pooled = lidar_img.reshape(B, N, fH, ds, fW, ds).max(axis=(3, 5))
        ref = _geometry_ref(frustum, ipr, comb, post_trans, trans, pooled)
        assert jnp.allclose(geoms[i], ref, atol=1e-2, rtol=1e-3), \
            f"geometry mismatch at level {i}"

    # --- full forward ---
    out = lidar_projection_forward([x0, x1], lidar_img, rots, trans, intrins,
                                   post_rots, post_trans, shape_info,
                                   grid_conf, final_dim, camC=camC,
                                   use_fpn=False)
    out = jax.block_until_ready(out)
    assert out.shape == (B, camC * 1, 32, 32), out.shape
    print("KERNEL_OK")
</pallas_src>

<mosaic_0001>
module attributes {stable_mosaic.version = 11 : i64} {
  func.func @_geom_kernel(%arg0: i32, %arg1: memref<3x16x128xf32, #tpu.memory_space<vmem>>, %arg2: memref<12x16x128xf32, #tpu.memory_space<vmem>>, %arg3: memref<3x16x128xf32, #tpu.memory_space<vmem>>) attributes {dimension_semantics = [#tpu.dimension_semantics<parallel>], iteration_bounds = array<i64: 1>, scalar_prefetch = 0 : i64, scratch_operands = 0 : i64, tpu.core_type = #tpu.core_type<tc>, window_params = [{transform_indices = @transform_0, window_bounds = array<i64: 3, 16, 128>}, {transform_indices = @transform_1, window_bounds = array<i64: 12, 16, 128>}, {transform_indices = @transform_2, window_bounds = array<i64: 3, 16, 128>}]} {
    %c0 = arith.constant 0 : index
    %c0_0 = arith.constant 0 : index
    %c0_1 = arith.constant 0 : index
    %0 = vector.load %arg1[%c0, %c0_0, %c0_1] : memref<3x16x128xf32, #tpu.memory_space<vmem>>, vector<1x16x128xf32>
    %1 = vector.shape_cast %0 : vector<1x16x128xf32> to vector<16x128xf32>
    %c1 = arith.constant 1 : index
    %c0_2 = arith.constant 0 : index
    %c0_3 = arith.constant 0 : index
    %2 = vector.load %arg1[%c1, %c0_2, %c0_3] : memref<3x16x128xf32, #tpu.memory_space<vmem>>, vector<1x16x128xf32>
    %3 = vector.shape_cast %2 : vector<1x16x128xf32> to vector<16x128xf32>
    %c2 = arith.constant 2 : index
    %c0_4 = arith.constant 0 : index
    %c0_5 = arith.constant 0 : index
    %4 = vector.load %arg1[%c2, %c0_4, %c0_5] : memref<3x16x128xf32, #tpu.memory_space<vmem>>, vector<1x16x128xf32>
    %5 = vector.shape_cast %4 : vector<1x16x128xf32> to vector<16x128xf32>
    %cst = arith.constant 0.000000e+00 : f32
    %6 = vector.broadcast %cst : f32 to vector<16x128xf32>
    %7 = arith.cmpf oeq, %5, %6 : vector<16x128xf32>
    %cst_6 = arith.constant 2.000000e+02 : f32
    %8 = vector.broadcast %cst_6 : f32 to vector<16x128xf32>
    %9 = arith.select %7, %8, %5 : vector<16x128xi1>, vector<16x128xf32>
    %c0_7 = arith.constant 0 : index
    %c0_8 = arith.constant 0 : index
    %c0_9 = arith.constant 0 : index
    %10 = vector.load %arg2[%c0_7, %c0_8, %c0_9] : memref<12x16x128xf32, #tpu.memory_space<vmem>>, vector<1x16x128xf32>
    %11 = vector.shape_cast %10 : vector<1x16x128xf32> to vector<16x128xf32>
    %12 = arith.mulf %11, %1 : vector<16x128xf32>
    %c3 = arith.constant 3 : index
    %c0_10 = arith.constant 0 : index
    %c0_11 = arith.constant 0 : index
    %13 = vector.load %arg2[%c3, %c0_10, %c0_11] : memref<12x16x128xf32, #tpu.memory_space<vmem>>, vector<1x16x128xf32>
    %14 = vector.shape_cast %13 : vector<1x16x128xf32> to vector<16x128xf32>
    %15 = arith.mulf %14, %3 : vector<16x128xf32>
    %16 = arith.addf %12, %15 : vector<16x128xf32>
    %c6 = arith.constant 6 : index
    %c0_12 = arith.constant 0 : index
    %c0_13 = arith.constant 0 : index
    %17 = vector.load %arg2[%c6, %c0_12, %c0_13] : memref<12x16x128xf32, #tpu.memory_space<vmem>>, vector<1x16x128xf32>
    %18 = vector.shape_cast %17 : vector<1x16x128xf32> to vector<16x128xf32>
    %19 = arith.addf %16, %18 : vector<16x128xf32>
    %20 = arith.mulf %9, %19 : vector<16x128xf32>
    %c9 = arith.constant 9 : index
    %c0_14 = arith.constant 0 : index
    %c0_15 = arith.constant 0 : index
    %21 = vector.load %arg2[%c9, %c0_14, %c0_15] : memref<12x16x128xf32, #tpu.memory_space<vmem>>, vector<1x16x128xf32>
    %22 = vector.shape_cast %21 : vector<1x16x128xf32> to vector<16x128xf32>
    %23 = arith.addf %20, %22 : vector<16x128xf32>
    %c0_16 = arith.constant 0 : index
    %c0_17 = arith.constant 0 : index
    %c0_18 = arith.constant 0 : index
    %24 = vector.load %arg3[%c0_16, %c0_17, %c0_18] : memref<3x16x128xf32, #tpu.memory_space<vmem>>, vector<1x16x128xf32>
    %25 = vector.shape_cast %24 : vector<1x16x128xf32> to vector<16x128xf32>
    %26 = vector.shape_cast %23 : vector<16x128xf32> to vector<1x16x128xf32>
    tpu.vector_store %arg3[%c0_16, %c0_17, %c0_18], %26 {strides = array<i32>} : memref<3x16x128xf32, #tpu.memory_space<vmem>>, vector<1x16x128xf32>,
    %c1_19 = arith.constant 1 : index
    %c0_20 = arith.constant 0 : index
    %c0_21 = arith.constant 0 : index
    %27 = vector.load %arg2[%c1_19, %c0_20, %c0_21] : memref<12x16x128xf32, #tpu.memory_space<vmem>>, vector<1x16x128xf32>
    %28 = vector.shape_cast %27 : vector<1x16x128xf32> to vector<16x128xf32>
    %29 = arith.mulf %28, %1 : vector<16x128xf32>
    %c4 = arith.constant 4 : index
    %c0_22 = arith.constant 0 : index
    %c0_23 = arith.constant 0 : index
    %30 = vector.load %arg2[%c4, %c0_22, %c0_23] : memref<12x16x128xf32, #tpu.memory_space<vmem>>, vector<1x16x128xf32>
    %31 = vector.shape_cast %30 : vector<1x16x128xf32> to vector<16x128xf32>
    %32 = arith.mulf %31, %3 : vector<16x128xf32>
    %33 = arith.addf %29, %32 : vector<16x128xf32>
    %c7 = arith.constant 7 : index
    %c0_24 = arith.constant 0 : index
    %c0_25 = arith.constant 0 : index
    %34 = vector.load %arg2[%c7, %c0_24, %c0_25] : memref<12x16x128xf32, #tpu.memory_space<vmem>>, vector<1x16x128xf32>
    %35 = vector.shape_cast %34 : vector<1x16x128xf32> to vector<16x128xf32>
    %36 = arith.addf %33, %35 : vector<16x128xf32>
    %37 = arith.mulf %9, %36 : vector<16x128xf32>
    %c10 = arith.constant 10 : index
    %c0_26 = arith.constant 0 : index
    %c0_27 = arith.constant 0 : index
    %38 = vector.load %arg2[%c10, %c0_26, %c0_27] : memref<12x16x128xf32, #tpu.memory_space<vmem>>, vector<1x16x128xf32>
    %39 = vector.shape_cast %38 : vector<1x16x128xf32> to vector<16x128xf32>
    %40 = arith.addf %37, %39 : vector<16x128xf32>
    %c1_28 = arith.constant 1 : index
    %c0_29 = arith.constant 0 : index
    %c0_30 = arith.constant 0 : index
    %41 = vector.load %arg3[%c1_28, %c0_29, %c0_30] : memref<3x16x128xf32, #tpu.memory_space<vmem>>, vector<1x16x128xf32>
    %42 = vector.shape_cast %41 : vector<1x16x128xf32> to vector<16x128xf32>
    %43 = vector.shape_cast %40 : vector<16x128xf32> to vector<1x16x128xf32>
    tpu.vector_store %arg3[%c1_28, %c0_29, %c0_30], %43 {strides = array<i32>} : memref<3x16x128xf32, #tpu.memory_space<vmem>>, vector<1x16x128xf32>,
    %c2_31 = arith.constant 2 : index
    %c0_32 = arith.constant 0 : index
    %c0_33 = arith.constant 0 : index
    %44 = vector.load %arg2[%c2_31, %c0_32, %c0_33] : memref<12x16x128xf32, #tpu.memory_space<vmem>>, vector<1x16x128xf32>
    %45 = vector.shape_cast %44 : vector<1x16x128xf32> to vector<16x128xf32>
    %46 = arith.mulf %45, %1 : vector<16x128xf32>
    %c5 = arith.constant 5 : index
    %c0_34 = arith.constant 0 : index
    %c0_35 = arith.constant 0 : index
    %47 = vector.load %arg2[%c5, %c0_34, %c0_35] : memref<12x16x128xf32, #tpu.memory_space<vmem>>, vector<1x16x128xf32>
    %48 = vector.shape_cast %47 : vector<1x16x128xf32> to vector<16x128xf32>
    %49 = arith.mulf %48, %3 : vector<16x128xf32>
    %50 = arith.addf %46, %49 : vector<16x128xf32>
    %c8 = arith.constant 8 : index
    %c0_36 = arith.constant 0 : index
    %c0_37 = arith.constant 0 : index
    %51 = vector.load %arg2[%c8, %c0_36, %c0_37] : memref<12x16x128xf32, #tpu.memory_space<vmem>>, vector<1x16x128xf32>
    %52 = vector.shape_cast %51 : vector<1x16x128xf32> to vector<16x128xf32>
    %53 = arith.addf %50, %52 : vector<16x128xf32>
    %54 = arith.mulf %9, %53 : vector<16x128xf32>
    %c11 = arith.constant 11 : index
    %c0_38 = arith.constant 0 : index
    %c0_39 = arith.constant 0 : index
    %55 = vector.load %arg2[%c11, %c0_38, %c0_39] : memref<12x16x128xf32, #tpu.memory_space<vmem>>, vector<1x16x128xf32>
    %56 = vector.shape_cast %55 : vector<1x16x128xf32> to vector<16x128xf32>
    %57 = arith.addf %54, %56 : vector<16x128xf32>
    %c2_40 = arith.constant 2 : index
    %c0_41 = arith.constant 0 : index
    %c0_42 = arith.constant 0 : index
    %58 = vector.load %arg3[%c2_40, %c0_41, %c0_42] : memref<3x16x128xf32, #tpu.memory_space<vmem>>, vector<1x16x128xf32>
    %59 = vector.shape_cast %58 : vector<1x16x128xf32> to vector<16x128xf32>
    %60 = vector.shape_cast %57 : vector<16x128xf32> to vector<1x16x128xf32>
    tpu.vector_store %arg3[%c2_40, %c0_41, %c0_42], %60 {strides = array<i32>} : memref<3x16x128xf32, #tpu.memory_space<vmem>>, vector<1x16x128xf32>,
    return
  }
  func.func @transform_0(%arg0: i32) -> (i32, i32, i32) {
    %c0_i32 = arith.constant 0 : i32
    %c0_i32_0 = arith.constant 0 : i32
    %c0_i32_1 = arith.constant 0 : i32
    return %c0_i32, %arg0, %c0_i32_0 : i32, i32, i32
  }
  func.func @transform_1(%arg0: i32) -> (i32, i32, i32) {
    %c0_i32 = arith.constant 0 : i32
    %c0_i32_0 = arith.constant 0 : i32
    %c0_i32_1 = arith.constant 0 : i32
    return %c0_i32, %arg0, %c0_i32_0 : i32, i32, i32
  }
  func.func @transform_2(%arg0: i32) -> (i32, i32, i32) {
    %c0_i32 = arith.constant 0 : i32
    %c0_i32_0 = arith.constant 0 : i32
    %c0_i32_1 = arith.constant 0 : i32
    return %c0_i32, %arg0, %c0_i32_0 : i32, i32, i32
  }
}

</mosaic_0001>

<llo_original>
// kernel: tpu_custom_call.1
$region0: #{tpu_custom_call.1}
  #allocation0 [shape = 'u32[]', space=smem, size = 0x4, offset = 0x4, fixed_abs, tag = 'smem constant byte address 0x4 - core index']
  #allocation1 [shape = 'u32[144,128]{1,0:T(1,128)}', space=vmem, size = 0x12000, scoped, tag = 'internal scratch']
  %s0 = inlined_call_operand.hbm [shape: f32[3,16,128], index: 0, kind: input, shape index: {}]
  %s1 = inlined_call_operand.hbm [shape: f32[12,16,128], index: 1, kind: input, shape index: {}]
  %s2 = inlined_call_operand.hbm [shape: f32[3,16,128], index: 2, kind: output, shape index: {}]
  %s3 = sld [smem:[#allocation0]]
  $region26: #{tpu_custom_call.1} parent=0
    _
  %s5 = ssub.s32 1, %s3
  %s6 = scalar_select 0, %s5, %s3
  $region1: #{tpu_custom_call.1} parent=0
    #allocation2 [shape = 'u8[24576]{0}', space=vmem, size = 0x6000, scoped, tag = 'input window, operand 0, single buffered']
    #allocation3 [shape = 's32[1]{0}', space=sflag, size = 0x4, scoped, tag = 'scoped memory for tpu_custom_call.1']
    #allocation4 [shape = 's32[1]{0}', space=sflag, size = 0x4, scoped, tag = 'scoped memory for tpu_custom_call.1']
    #allocation5 [shape = 'u8[98304]{0}', space=vmem, size = 0x18000, scoped, tag = 'input window, operand 1, single buffered']
    #allocation6 [shape = 's32[1]{0}', space=sflag, size = 0x4, scoped, tag = 'scoped memory for tpu_custom_call.1']
    #allocation7 [shape = 'u8[24576]{0}', space=vmem, size = 0x6000, scoped, tag = 'output window, operand 0, single buffered']
    %7 = vsyncpa [#allocation3], 0
    %8 = vsyncpa [#allocation6], 0
    %9 = vsyncpa [#allocation4], 0
    // Predicated region
    $region2: #{tpu_custom_call.1} parent=1 // pred_check
      _
    $region3: #{tpu_custom_call.1} parent=1 // pred_check_branch
      %11 = sbr.rel (0) target = $region5
    $region4: #{tpu_custom_call.1} parent=1 // pred_region
      %s13 = ssub.s32 768, 768
      %14 = vsyncadd [#allocation3], %s13
      %s15 = sshll.u32 [#allocation2], 4
      %s16 = int_to_ptr.vmem [resolvable:$true] %s15
      %21 = dma.hbm_to_vmem [thread:$0]  %s0, 768, %s16, [#allocation3], 128, 128, 8
    $region5: #{tpu_custom_call.1} parent=1 // pred_fallthru
      _
    // Predicated region
    $region6: #{tpu_custom_call.1} parent=1 // pred_check
      _
    $region7: #{tpu_custom_call.1} parent=1 // pred_check_branch
      %23 = sbr.rel (0) target = $region9
    $region8: #{tpu_custom_call.1} parent=1 // pred_region
      %s25 = ssub.s32 3072, 3072
      %26 = vsyncadd [#allocation6], %s25
      %s27 = sshll.u32 [#allocation5], 4
      %s28 = int_to_ptr.vmem [resolvable:$true] %s27
      %33 = dma.hbm_to_vmem [thread:$0]  %s1, 3072, %s28, [#allocation6], 128, 128, 8
    $region9: #{tpu_custom_call.1} parent=1 // pred_fallthru
      _
    // Predicated region
    $region10: #{tpu_custom_call.1} parent=1 // pred_check
      _
    $region11: #{tpu_custom_call.1} parent=1 // pred_check_branch
      %35 = sbr.rel (0) target = $region13
    $region12: #{tpu_custom_call.1} parent=1 // pred_region
      %36 = dma.done [#allocation3], 768
    $region13: #{tpu_custom_call.1} parent=1 // pred_fallthru
      _
    // Predicated region
    $region14: #{tpu_custom_call.1} parent=1 // pred_check
      _
    $region15: #{tpu_custom_call.1} parent=1 // pred_check_branch
      %38 = sbr.rel (0) target = $region17
    $region16: #{tpu_custom_call.1} parent=1 // pred_region
      %39 = dma.done [#allocation6], 3072
    $region17: #{tpu_custom_call.1} parent=1 // pred_fallthru
      _
    %v40 = vld [vmem:[#allocation2] sm:$0xff]
    %v41 = vld [vmem:[#allocation2 + $0x8] sm:$0xff]
    %s42 = scalar_lea.vmem [#allocation2], 16
    %v43 = vld [vmem:[%s42] sm:$0xff]
    %v44 = vld [vmem:[%s42 + $0x8] sm:$0xff]
    %s45 = scalar_lea.vmem [#allocation2], 32
    %v46 = vld [vmem:[%s45] sm:$0xff]
    %v47 = vld [vmem:[%s45 + $0x8] sm:$0xff]
    %vm48 = vcmp.eq.f32.partialorder %v46, 0.0
    %vm49 = vcmp.eq.f32.partialorder %v47, 0.0
    %v50 = vsel %vm48, 200.0, %v46
    %v51 = vsel %vm49, 200.0, %v47
    %v52 = vld [vmem:[#allocation5] sm:$0xff]
    %v53 = vld [vmem:[#allocation5 + $0x8] sm:$0xff]
    %v54 = vmul.f32 %v52, %v40
    %v55 = vmul.f32 %v53, %v41
    %s56 = scalar_lea.vmem [#allocation5], 48
    %v57 = vld [vmem:[%s56] sm:$0xff]
    %v58 = vld [vmem:[%s56 + $0x8] sm:$0xff]
    %v59 = vmul.f32 %v57, %v43
    %v60 = vmul.f32 %v58, %v44
    %v61 = vadd.f32 %v54, %v59
    %v62 = vadd.f32 %v55, %v60
    %s63 = scalar_lea.vmem [#allocation5], 96
    %v64 = vld [vmem:[%s63] sm:$0xff]
    %v65 = vld [vmem:[%s63 + $0x8] sm:$0xff]
    %v66 = vadd.f32 %v61, %v64
    %v67 = vadd.f32 %v62, %v65
    %v68 = vmul.f32 %v50, %v66
    %v69 = vmul.f32 %v51, %v67
    %s70 = scalar_lea.vmem [#allocation5], 144
    %v71 = vld [vmem:[%s70] sm:$0xff]
    %v72 = vld [vmem:[%s70 + $0x8] sm:$0xff]
    %v73 = vadd.f32 %v68, %v71
    %v74 = vadd.f32 %v69, %v72
    %75 = vst [vmem:[#allocation7] sm:$0xff] %v73
    %76 = vst [vmem:[#allocation7 + $0x8] sm:$0xff] %v74
    %s77 = scalar_lea.vmem [#allocation5], 16
    %v78 = vld [vmem:[%s77] sm:$0xff]
    %v79 = vld [vmem:[%s77 + $0x8] sm:$0xff]
    %v80 = vmul.f32 %v78, %v40
    %v81 = vmul.f32 %v79, %v41
    %s82 = scalar_lea.vmem [#allocation5], 64
    %v83 = vld [vmem:[%s82] sm:$0xff]
    %v84 = vld [vmem:[%s82 + $0x8] sm:$0xff]
    %v85 = vmul.f32 %v83, %v43
    %v86 = vmul.f32 %v84, %v44
    %v87 = vadd.f32 %v80, %v85
    %v88 = vadd.f32 %v81, %v86
    %s89 = scalar_lea.vmem [#allocation5], 112
    %v90 = vld [vmem:[%s89] sm:$0xff]
    %v91 = vld [vmem:[%s89 + $0x8] sm:$0xff]
    %v92 = vadd.f32 %v87, %v90
    %v93 = vadd.f32 %v88, %v91
    %v94 = vmul.f32 %v50, %v92
    %v95 = vmul.f32 %v51, %v93
    %s96 = scalar_lea.vmem [#allocation5], 160
    %v97 = vld [vmem:[%s96] sm:$0xff]
    %v98 = vld [vmem:[%s96 + $0x8] sm:$0xff]
    %v99 = vadd.f32 %v94, %v97
    %v100 = vadd.f32 %v95, %v98
    %s101 = scalar_lea.vmem [#allocation7], 16
    %102 = vst [vmem:[%s101] sm:$0xff] %v99
    %103 = vst [vmem:[%s101 + $0x8] sm:$0xff] %v100
    %s104 = scalar_lea.vmem [#allocation5], 32
    %v105 = vld [vmem:[%s104] sm:$0xff]
    %v106 = vld [vmem:[%s104 + $0x8] sm:$0xff]
    %v107 = vmul.f32 %v105, %v40
    %v108 = vmul.f32 %v106, %v41
    %s109 = scalar_lea.vmem [#allocation5], 80
    %v110 = vld [vmem:[%s109] sm:$0xff]
    %v111 = vld [vmem:[%s109 + $0x8] sm:$0xff]
    %v112 = vmul.f32 %v110, %v43
    %v113 = vmul.f32 %v111, %v44
    %v114 = vadd.f32 %v107, %v112
    %v115 = vadd.f32 %v108, %v113
    %s116 = scalar_lea.vmem [#allocation5], 128
    %v117 = vld [vmem:[%s116] sm:$0xff]
    %v118 = vld [vmem:[%s116 + $0x8] sm:$0xff]
    %v119 = vadd.f32 %v114, %v117
    %v120 = vadd.f32 %v115, %v118
    %v121 = vmul.f32 %v50, %v119
    %v122 = vmul.f32 %v51, %v120
    %s123 = scalar_lea.vmem [#allocation5], 176
    %v124 = vld [vmem:[%s123] sm:$0xff]
    %v125 = vld [vmem:[%s123 + $0x8] sm:$0xff]
    %v126 = vadd.f32 %v121, %v124
    %v127 = vadd.f32 %v122, %v125
    %s128 = scalar_lea.vmem [#allocation7], 32
    %129 = vst [vmem:[%s128] sm:$0xff] %v126
    %130 = vst [vmem:[%s128 + $0x8] sm:$0xff] %v127
    // Predicated region
    $region18: #{tpu_custom_call.1} parent=1 // pred_check
      _
    $region19: #{tpu_custom_call.1} parent=1 // pred_check_branch
      %132 = sbr.rel (0) target = $region21
    $region20: #{tpu_custom_call.1} parent=1 // pred_region
      %s134 = ssub.s32 768, 768
      %135 = vsyncadd [#allocation4], %s134
      %s136 = sshll.u32 [#allocation7], 4
      %s137 = int_to_ptr.vmem [resolvable:$true] %s136
      %142 = dma.vmem_to_hbm [thread:$0]  %s137, 768, %s2, [#allocation4], 128, 128, 8
    $region21: #{tpu_custom_call.1} parent=1 // pred_fallthru
      _
    // Predicated region
    $region22: #{tpu_custom_call.1} parent=1 // pred_check
      _
    $region23: #{tpu_custom_call.1} parent=1 // pred_check_branch
      %144 = sbr.rel (0) target = $region25
    $region24: #{tpu_custom_call.1} parent=1 // pred_region
      %145 = dma.done [#allocation4], 768
    $region25: #{tpu_custom_call.1} parent=1 // pred_fallthru
      _
    %146 = vsyncpa [#allocation3], 1
    %147 = vsyncpa [#allocation6], 1
    %148 = vsyncpa [#allocation4], 1

</llo_original>
